<compile_context>
chip_gen: v7x
topology: tpu7x:2x2x1
jax: 0.10.0
libtpu: 0.0.40
codegen_flags: <defaults>
</compile_context>

<pallas_src>
import jax
import jax.numpy as jnp
from jax import lax
from jax.experimental import pallas as pl
from jax.experimental.pallas import tpu as pltpu

STDDEV_OFFSET = 1e-5  # module-level constant in the source repo (small positive offset)

LANES = 128
SUBLANES = 8


def _round_up(x, m):
    return ((x + m - 1) // m) * m


def _softplus(x):
    # matches torch.nn.functional.softplus (beta=1, threshold=20), numerically stable
    return jnp.where(x > 20.0, x, jnp.log1p(jnp.exp(jnp.minimum(x, 20.0))))


def make_decoder_kernel(num_hidden, n_obs):
    def kernel(*refs):
        if num_hidden > 0:
            x_ref, w0_ref, b0_ref, wh_ref, bh_ref, wH_ref, bH_ref, out_ref = refs
        else:
            x_ref, w0_ref, b0_ref, wH_ref, bH_ref, out_ref = refs
            wh_ref = bh_ref = None

        # input layer: Linear(n_latents, units) + relu
        # bf16 operands -> MXU, f32 accumulation; bias/relu math in f32.
        h = jnp.dot(x_ref[...].astype(jnp.bfloat16), w0_ref[...],
                    preferred_element_type=jnp.float32) + b0_ref[...]
        h = jnp.maximum(h, 0.0)

        # hidden layers: (layers - 1) x [Linear(units, units) + relu]
        for l in range(num_hidden):
            h = jnp.dot(h.astype(jnp.bfloat16), wh_ref[l],
                        preferred_element_type=jnp.float32) + bh_ref[l]
            h = jnp.maximum(h, 0.0)

        # fused heads: one lane-dense matmul producing [mean || pre_std] (2*n_obs wide)
        heads = jnp.dot(h.astype(jnp.bfloat16), wH_ref[...],
                        preferred_element_type=jnp.float32) + bH_ref[...]
        # columns [0, n_obs) -> mean (identity); columns [n_obs, ...) -> softplus + offset.
        col = lax.broadcasted_iota(jnp.int32, heads.shape, 1)
        std = _softplus(heads) + STDDEV_OFFSET   # EUP work; selected away for mean cols
        out_ref[...] = jnp.where(col < n_obs, heads, std).astype(out_ref.dtype)

    return kernel


def prepare_params(p, n_latents, units, n_obs, num_hidden, weight_dtype=jnp.bfloat16):
    """One-time: fuse the two heads, zero-pad output feature dims to 128 lanes,
    and cast weight matrices (not biases) to bf16 for the MXU."""
    U_pad = _round_up(units, LANES)
    H_pad = _round_up(2 * n_obs, LANES)

    # input layer: keep the K dim at n_latents (no lane padding of x).
    w0 = jnp.zeros((n_latents, U_pad), weight_dtype).at[:, :units].set(
        p["w0"].astype(weight_dtype))
    b0 = jnp.zeros((1, U_pad), jnp.float32).at[0, :units].set(p["b0"])
    prep = dict(w0=w0, b0=b0)

    if num_hidden > 0:
        wh = jnp.zeros((num_hidden, U_pad, U_pad), weight_dtype).at[
            :, :units, :units].set(p["wh"].astype(weight_dtype))
        bh = jnp.zeros((num_hidden, 1, U_pad), jnp.float32).at[:, 0, :units].set(p["bh"])
        prep.update(wh=wh, bh=bh)

    w_heads = jnp.concatenate([p["wm"], p["ws"]], axis=1)   # [units, 2*n_obs]
    b_heads = jnp.concatenate([p["bm"], p["bs"]], axis=0)   # [2*n_obs]
    wH = jnp.zeros((U_pad, H_pad), weight_dtype).at[:units, :2 * n_obs].set(
        w_heads.astype(weight_dtype))
    bH = jnp.zeros((1, H_pad), jnp.float32).at[0, :2 * n_obs].set(b_heads)
    prep.update(w_heads=wH, b_heads=bH)
    return prep


def gauss_dense_decoder(x, prep, *, n_latents, units, n_obs, num_hidden,
                        max_tile=1024, return_packed=False):
    """x: [B, n_latents] f32 -> (mean [B, n_obs], stddev [B, n_obs]).

    If return_packed=True, returns the raw packed [B_pad, H_pad] block
    (mean in cols [0, n_obs), stddev in cols [n_obs, 2*n_obs)) to avoid the
    two post-kernel slice copies."""
    B = x.shape[0]
    U_pad = prep["w0"].shape[1]
    H_pad = prep["w_heads"].shape[1]

    # Adaptive batch tiling: single tile for small/medium B; otherwise tiles of at most
    # ~max_tile rows, with TB chosen so pad waste is <= 8 rows per tile.
    B8 = _round_up(max(B, SUBLANES), SUBLANES)
    n_tiles = pl.cdiv(B8, max_tile)
    TB = _round_up(pl.cdiv(B8, n_tiles), SUBLANES)
    B_pad = TB * n_tiles
    grid = (n_tiles,)

    if B_pad != B:
        x = jnp.pad(x, ((0, B_pad - B), (0, 0)))   # pad batch dim only

    kernel = make_decoder_kernel(num_hidden, n_obs)

    in_specs = [
        pl.BlockSpec((TB, n_latents), lambda i: (i, 0)),        # x: tiled over batch
        pl.BlockSpec((n_latents, U_pad), lambda i: (0, 0)),     # w0: resident
        pl.BlockSpec((1, U_pad), lambda i: (0, 0)),             # b0 (row)
    ]
    args = [x, prep["w0"], prep["b0"]]
    if num_hidden > 0:
        in_specs += [
            pl.BlockSpec((num_hidden, U_pad, U_pad), lambda i: (0, 0, 0)),  # hidden weights
            pl.BlockSpec((num_hidden, 1, U_pad), lambda i: (0, 0, 0)),      # hidden biases
        ]
        args += [prep["wh"], prep["bh"]]
    in_specs += [
        pl.BlockSpec((U_pad, H_pad), lambda i: (0, 0)),         # fused head weights
        pl.BlockSpec((1, H_pad), lambda i: (0, 0)),             # fused head bias (row)
    ]
    args += [prep["w_heads"], prep["b_heads"]]

    flops = 2 * B_pad * (n_latents * U_pad + num_hidden * U_pad * U_pad + U_pad * H_pad)
    bytes_accessed = (
        sum(int(v.size) * v.dtype.itemsize for v in prep.values())
        + int(x.size) * x.dtype.itemsize
        + B_pad * H_pad * 4
    )
    cost = pl.CostEstimate(flops=flops,
                           transcendentals=2 * B_pad * H_pad,  # exp + log1p per padded lane
                           bytes_accessed=bytes_accessed)

    out = pl.pallas_call(
        kernel,
        out_shape=jax.ShapeDtypeStruct((B_pad, H_pad), jnp.float32),
        grid=grid,
        in_specs=in_specs,
        out_specs=pl.BlockSpec((TB, H_pad), lambda i: (i, 0)),  # lane-dense 128-wide output
        compiler_params=pltpu.CompilerParams(
            dimension_semantics=(pltpu.PARALLEL,)),
        cost_estimate=cost,
    )(*args)

    if return_packed:
        return out
    mean = out[:B, :n_obs]
    stddev = out[:B, n_obs:2 * n_obs]
    return mean, stddev


# ---------------------------------------------------------------------------
# init + pure-JAX reference (mirrors the torch module with W stored [in, out])
# ---------------------------------------------------------------------------

def init_params(key, n_latents, units, n_obs, num_hidden, scale=0.1):
    ks = jax.random.split(key, 8)
    return {
        "w0": scale * jax.random.normal(ks[0], (n_latents, units), jnp.float32),
        "b0": scale * jax.random.normal(ks[1], (units,), jnp.float32),
        "wh": scale * jax.random.normal(ks[2], (num_hidden, units, units), jnp.float32),
        "bh": scale * jax.random.normal(ks[3], (num_hidden, units), jnp.float32),
        "wm": scale * jax.random.normal(ks[4], (units, n_obs), jnp.float32),
        "bm": scale * jax.random.normal(ks[5], (n_obs,), jnp.float32),
        "ws": scale * jax.random.normal(ks[6], (units, n_obs), jnp.float32),
        "bs": scale * jax.random.normal(ks[7], (n_obs,), jnp.float32),
    }


def reference_forward(x, p, num_hidden):
    h = jnp.maximum(x @ p["w0"] + p["b0"], 0.0)
    for l in range(num_hidden):
        h = jnp.maximum(h @ p["wh"][l] + p["bh"][l], 0.0)
    mean = h @ p["wm"] + p["bm"]
    std = jax.nn.softplus(h @ p["ws"] + p["bs"]) + STDDEV_OFFSET
    return mean, std


if __name__ == "__main__":
    # module config: n_latents=32, observation_shape=(4,16) -> n_obs=64, layers=3, units=64
    batch, n_latents, units, layers = 8, 32, 64, 3
    observation_shape = (4, 16)
    n_obs = int(observation_shape[0] * observation_shape[1])
    num_hidden = layers - 1

    key = jax.random.PRNGKey(0)
    k_x, k_p = jax.random.split(key)
    x = jax.random.normal(k_x, (batch, n_latents), jnp.float32)
    params = init_params(k_p, n_latents, units, n_obs, num_hidden)
    prep = prepare_params(params, n_latents, units, n_obs, num_hidden)

    mean, stddev = gauss_dense_decoder(
        x, prep, n_latents=n_latents, units=units, n_obs=n_obs, num_hidden=num_hidden)
    mean = jax.block_until_ready(mean)
    stddev = jax.block_until_ready(stddev)

    mean_ref, std_ref = reference_forward(x, params, num_hidden)
    assert mean.shape == (batch, n_obs) and stddev.shape == (batch, n_obs)
    # bf16 MXU operands with f32 accumulation -> ~1e-2-level agreement with the f32 reference
    assert jnp.allclose(mean, mean_ref, atol=2e-2, rtol=2e-2)
    assert jnp.allclose(stddev, std_ref, atol=2e-2, rtol=2e-2)
    assert bool(jnp.all(stddev > 0.0))

    # TODO(synk): the torch module returns a MultivariateNormalDiag distribution object;
    # here we return its (mean, stddev) parameters, which is the full forward computation.
    print("KERNEL_OK")
</pallas_src>

<mosaic_0001>
module attributes {stable_mosaic.version = 11 : i64} {
  func.func @kernel(%arg0: i32, %arg1: memref<8x32xf32, #tpu.memory_space<vmem>>, %arg2: memref<32x128xbf16, #tpu.memory_space<vmem>>, %arg3: memref<1x128xf32, #tpu.memory_space<vmem>>, %arg4: memref<2x128x128xbf16, #tpu.memory_space<vmem>>, %arg5: memref<2x1x128xf32, #tpu.memory_space<vmem>>, %arg6: memref<128x128xbf16, #tpu.memory_space<vmem>>, %arg7: memref<1x128xf32, #tpu.memory_space<vmem>>, %arg8: memref<8x128xf32, #tpu.memory_space<vmem>>) attributes {dimension_semantics = [#tpu.dimension_semantics<parallel>], iteration_bounds = array<i64: 1>, scalar_prefetch = 0 : i64, scratch_operands = 0 : i64, tpu.core_type = #tpu.core_type<tc>, window_params = [{transform_indices = @transform_0, window_bounds = array<i64: 8, 32>}, {pipeline_mode = #tpu.pipeline_mode<synchronous>, transform_indices = @transform_1, window_bounds = array<i64: 32, 128>}, {pipeline_mode = #tpu.pipeline_mode<synchronous>, transform_indices = @transform_2, window_bounds = array<i64: 1, 128>}, {pipeline_mode = #tpu.pipeline_mode<synchronous>, transform_indices = @transform_3, window_bounds = array<i64: 2, 128, 128>}, {pipeline_mode = #tpu.pipeline_mode<synchronous>, transform_indices = @transform_4, window_bounds = array<i64: 2, 1, 128>}, {pipeline_mode = #tpu.pipeline_mode<synchronous>, transform_indices = @transform_5, window_bounds = array<i64: 128, 128>}, {pipeline_mode = #tpu.pipeline_mode<synchronous>, transform_indices = @transform_6, window_bounds = array<i64: 1, 128>}, {transform_indices = @transform_7, window_bounds = array<i64: 8, 128>}]} {
    %c0 = arith.constant 0 : index
    %c0_0 = arith.constant 0 : index
    %0 = vector.load %arg1[%c0, %c0_0] : memref<8x32xf32, #tpu.memory_space<vmem>>, vector<8x32xf32>
    %1 = arith.truncf %0 : vector<8x32xf32> to vector<8x32xbf16>
    %c0_1 = arith.constant 0 : index
    %c0_2 = arith.constant 0 : index
    %2 = vector.load %arg2[%c0_1, %c0_2] : memref<32x128xbf16, #tpu.memory_space<vmem>>, vector<32x128xbf16>
    %cst = arith.constant dense<0.000000e+00> : vector<8x128xf32>
    %3 = tpu.matmul %1, %2, %cst {dimension_numbers = #tpu.dot_dimension_numbers<[1], [0], [0], [1], [0, 0, 1, 1], [], []>} : vector<8x32xbf16>, vector<32x128xbf16>, vector<8x128xf32> -> vector<8x128xf32>
    %c0_3 = arith.constant 0 : index
    %c0_4 = arith.constant 0 : index
    %4 = vector.load %arg3[%c0_3, %c0_4] : memref<1x128xf32, #tpu.memory_space<vmem>>, vector<1x128xf32>
    %5 = vector.broadcast %4 : vector<1x128xf32> to vector<8x128xf32>
    %6 = arith.addf %3, %5 : vector<8x128xf32>
    %cst_5 = arith.constant 0.000000e+00 : f32
    %7 = vector.broadcast %cst_5 : f32 to vector<8x128xf32>
    %8 = arith.maximumf %6, %7 : vector<8x128xf32>
    %9 = arith.truncf %8 : vector<8x128xf32> to vector<8x128xbf16>
    %c0_6 = arith.constant 0 : index
    %c0_7 = arith.constant 0 : index
    %c0_8 = arith.constant 0 : index
    %10 = vector.load %arg4[%c0_6, %c0_7, %c0_8] : memref<2x128x128xbf16, #tpu.memory_space<vmem>>, vector<1x128x128xbf16>
    %11 = vector.shape_cast %10 : vector<1x128x128xbf16> to vector<128x128xbf16>
    %cst_9 = arith.constant dense<0.000000e+00> : vector<8x128xf32>
    %12 = tpu.matmul %9, %11, %cst_9 {dimension_numbers = #tpu.dot_dimension_numbers<[1], [0], [0], [1], [0, 0, 1, 1], [], []>} : vector<8x128xbf16>, vector<128x128xbf16>, vector<8x128xf32> -> vector<8x128xf32>
    %c0_10 = arith.constant 0 : index
    %c0_11 = arith.constant 0 : index
    %c0_12 = arith.constant 0 : index
    %13 = vector.load %arg5[%c0_10, %c0_11, %c0_12] : memref<2x1x128xf32, #tpu.memory_space<vmem>>, vector<1x1x128xf32>
    %14 = vector.shape_cast %13 : vector<1x1x128xf32> to vector<1x128xf32>
    %15 = vector.broadcast %14 : vector<1x128xf32> to vector<8x128xf32>
    %16 = arith.addf %12, %15 : vector<8x128xf32>
    %cst_13 = arith.constant 0.000000e+00 : f32
    %17 = vector.broadcast %cst_13 : f32 to vector<8x128xf32>
    %18 = arith.maximumf %16, %17 : vector<8x128xf32>
    %19 = arith.truncf %18 : vector<8x128xf32> to vector<8x128xbf16>
    %c1 = arith.constant 1 : index
    %c0_14 = arith.constant 0 : index
    %c0_15 = arith.constant 0 : index
    %20 = vector.load %arg4[%c1, %c0_14, %c0_15] : memref<2x128x128xbf16, #tpu.memory_space<vmem>>, vector<1x128x128xbf16>
    %21 = vector.shape_cast %20 : vector<1x128x128xbf16> to vector<128x128xbf16>
    %cst_16 = arith.constant dense<0.000000e+00> : vector<8x128xf32>
    %22 = tpu.matmul %19, %21, %cst_16 {dimension_numbers = #tpu.dot_dimension_numbers<[1], [0], [0], [1], [0, 0, 1, 1], [], []>} : vector<8x128xbf16>, vector<128x128xbf16>, vector<8x128xf32> -> vector<8x128xf32>
    %c1_17 = arith.constant 1 : index
    %c0_18 = arith.constant 0 : index
    %c0_19 = arith.constant 0 : index
    %23 = vector.load %arg5[%c1_17, %c0_18, %c0_19] : memref<2x1x128xf32, #tpu.memory_space<vmem>>, vector<1x1x128xf32>
    %24 = vector.shape_cast %23 : vector<1x1x128xf32> to vector<1x128xf32>
    %25 = vector.broadcast %24 : vector<1x128xf32> to vector<8x128xf32>
    %26 = arith.addf %22, %25 : vector<8x128xf32>
    %cst_20 = arith.constant 0.000000e+00 : f32
    %27 = vector.broadcast %cst_20 : f32 to vector<8x128xf32>
    %28 = arith.maximumf %26, %27 : vector<8x128xf32>
    %29 = arith.truncf %28 : vector<8x128xf32> to vector<8x128xbf16>
    %c0_21 = arith.constant 0 : index
    %c0_22 = arith.constant 0 : index
    %30 = vector.load %arg6[%c0_21, %c0_22] : memref<128x128xbf16, #tpu.memory_space<vmem>>, vector<128x128xbf16>
    %cst_23 = arith.constant dense<0.000000e+00> : vector<8x128xf32>
    %31 = tpu.matmul %29, %30, %cst_23 {dimension_numbers = #tpu.dot_dimension_numbers<[1], [0], [0], [1], [0, 0, 1, 1], [], []>} : vector<8x128xbf16>, vector<128x128xbf16>, vector<8x128xf32> -> vector<8x128xf32>
    %c0_24 = arith.constant 0 : index
    %c0_25 = arith.constant 0 : index
    %32 = vector.load %arg7[%c0_24, %c0_25] : memref<1x128xf32, #tpu.memory_space<vmem>>, vector<1x128xf32>
    %33 = vector.broadcast %32 : vector<1x128xf32> to vector<8x128xf32>
    %34 = arith.addf %31, %33 : vector<8x128xf32>
    %35 = tpu.iota {dimensions = array<i32: 1>} : vector<8x128xi32>
    %cst_26 = arith.constant 2.000000e+01 : f32
    %36 = vector.broadcast %cst_26 : f32 to vector<8x128xf32>
    %37 = arith.cmpf ogt, %34, %36 : vector<8x128xf32>
    %cst_27 = arith.constant 2.000000e+01 : f32
    %38 = vector.broadcast %cst_27 : f32 to vector<8x128xf32>
    %39 = arith.minimumf %34, %38 : vector<8x128xf32>
    %40 = math.exp %39 : vector<8x128xf32>
    %41 = math.log1p %40 : vector<8x128xf32>
    %42 = arith.select %37, %34, %41 : vector<8x128xi1>, vector<8x128xf32>
    %cst_28 = arith.constant 9.99999974E-6 : f32
    %43 = vector.broadcast %cst_28 : f32 to vector<8x128xf32>
    %44 = arith.addf %42, %43 : vector<8x128xf32>
    %c64_i32 = arith.constant 64 : i32
    %45 = vector.broadcast %c64_i32 : i32 to vector<8x128xi32>
    %46 = arith.cmpi slt, %35, %45 : vector<8x128xi32>
    %47 = arith.select %46, %34, %44 : vector<8x128xi1>, vector<8x128xf32>
    %c0_29 = arith.constant 0 : index
    %c0_30 = arith.constant 0 : index
    %48 = vector.load %arg8[%c0_29, %c0_30] : memref<8x128xf32, #tpu.memory_space<vmem>>, vector<8x128xf32>
    tpu.vector_store %arg8[%c0_29, %c0_30], %47 {strides = array<i32>} : memref<8x128xf32, #tpu.memory_space<vmem>>, vector<8x128xf32>,
    return
  }
  func.func @transform_0(%arg0: i32) -> (i32, i32) {
    %c0_i32 = arith.constant 0 : i32
    %c0_i32_0 = arith.constant 0 : i32
    return %arg0, %c0_i32 : i32, i32
  }
  func.func @transform_1(%arg0: i32) -> (i32, i32) {
    %c0_i32 = arith.constant 0 : i32
    %c0_i32_0 = arith.constant 0 : i32
    %c0_i32_1 = arith.constant 0 : i32
    return %c0_i32, %c0_i32_0 : i32, i32
  }
  func.func @transform_2(%arg0: i32) -> (i32, i32) {
    %c0_i32 = arith.constant 0 : i32
    %c0_i32_0 = arith.constant 0 : i32
    %c0_i32_1 = arith.constant 0 : i32
    return %c0_i32, %c0_i32_0 : i32, i32
  }
  func.func @transform_3(%arg0: i32) -> (i32, i32, i32) {
    %c0_i32 = arith.constant 0 : i32
    %c0_i32_0 = arith.constant 0 : i32
    %c0_i32_1 = arith.constant 0 : i32
    %c0_i32_2 = arith.constant 0 : i32
    return %c0_i32, %c0_i32_0, %c0_i32_1 : i32, i32, i32
  }
  func.func @transform_4(%arg0: i32) -> (i32, i32, i32) {
    %c0_i32 = arith.constant 0 : i32
    %c0_i32_0 = arith.constant 0 : i32
    %c0_i32_1 = arith.constant 0 : i32
    %c0_i32_2 = arith.constant 0 : i32
    return %c0_i32, %c0_i32_0, %c0_i32_1 : i32, i32, i32
  }
  func.func @transform_5(%arg0: i32) -> (i32, i32) {
    %c0_i32 = arith.constant 0 : i32
    %c0_i32_0 = arith.constant 0 : i32
    %c0_i32_1 = arith.constant 0 : i32
    return %c0_i32, %c0_i32_0 : i32, i32
  }
  func.func @transform_6(%arg0: i32) -> (i32, i32) {
    %c0_i32 = arith.constant 0 : i32
    %c0_i32_0 = arith.constant 0 : i32
    %c0_i32_1 = arith.constant 0 : i32
    return %c0_i32, %c0_i32_0 : i32, i32
  }
  func.func @transform_7(%arg0: i32) -> (i32, i32) {
    %c0_i32 = arith.constant 0 : i32
    %c0_i32_0 = arith.constant 0 : i32
    return %arg0, %c0_i32 : i32, i32
  }
}

</mosaic_0001>

<llo_original>
// kernel: tpu_custom_call.1
$region0: #{tpu_custom_call.1}
  #allocation0 [shape = 'u32[]', space=smem, size = 0x4, offset = 0x4, fixed_abs, tag = 'smem constant byte address 0x4 - core index']
  #allocation1 [shape = 'u32[144,128]{1,0:T(1,128)}', space=vmem, size = 0x12000, scoped, tag = 'internal scratch']
  %s0 = inlined_call_operand.hbm [shape: f32[8,32], index: 0, kind: input, shape index: {}]
  %s1 = inlined_call_operand.hbm [shape: bf16[32,128], index: 1, kind: input, shape index: {}]
  %s2 = inlined_call_operand.vmem [shape: f32[1,128], index: 2, kind: input, shape index: {}]
  %s3 = inlined_call_operand.hbm [shape: bf16[2,128,128], index: 3, kind: input, shape index: {}]
  %s4 = inlined_call_operand.vmem [shape: f32[2,1,128], index: 4, kind: input, shape index: {}]
  %s5 = inlined_call_operand.hbm [shape: bf16[128,128], index: 5, kind: input, shape index: {}]
  %s6 = inlined_call_operand.vmem [shape: f32[1,128], index: 6, kind: input, shape index: {}]
  %s7 = inlined_call_operand.hbm [shape: f32[8,128], index: 7, kind: output, shape index: {}]
  %s8 = sld [smem:[#allocation0]]
  $region54: #{tpu_custom_call.1} parent=0
    _
  %s10 = ssub.s32 1, %s8
  %s11 = scalar_select 0, %s10, %s8
  $region1: #{tpu_custom_call.1} parent=0
    #allocation2 [shape = 'u8[4096]{0}', space=vmem, size = 0x1000, scoped, tag = 'input window, operand 0, single buffered']
    #allocation3 [shape = 's32[1]{0}', space=sflag, size = 0x4, scoped, tag = 'scoped memory for tpu_custom_call.1']
    #allocation4 [shape = 's32[1]{0}', space=sflag, size = 0x4, scoped, tag = 'scoped memory for tpu_custom_call.1']
    #allocation5 [shape = 'u8[8192]{0}', space=vmem, size = 0x2000, scoped, tag = 'input window, operand 1, single buffered']
    #allocation6 [shape = 's32[1]{0}', space=sflag, size = 0x4, scoped, tag = 'scoped memory for tpu_custom_call.1']
    #allocation7 [shape = 'u8[65536]{0}', space=vmem, size = 0x10000, scoped, tag = 'input window, operand 3, single buffered']
    #allocation8 [shape = 'u8[32768]{0}', space=vmem, size = 0x8000, scoped, tag = 'input window, operand 5, single buffered']
    #allocation9 [shape = 's32[1]{0}', space=sflag, size = 0x4, scoped, tag = 'scoped memory for tpu_custom_call.1']
    #allocation10 [shape = 'u8[4096]{0}', space=vmem, size = 0x1000, scoped, tag = 'output window, operand 0, single buffered']
    %12 = vsyncpa [#allocation3], 0
    %13 = vsyncpa [#allocation6], 0
    %14 = vsyncpa [#allocation9], 0
    %15 = vsyncpa [#allocation4], 0
    // Predicated region
    $region2: #{tpu_custom_call.1} parent=1 // pred_check
      _
    $region3: #{tpu_custom_call.1} parent=1 // pred_check_branch
      %17 = sbr.rel (0) target = $region5
    $region4: #{tpu_custom_call.1} parent=1 // pred_region
      %s19 = ssub.s32 128, 128
      %20 = vsyncadd [#allocation3], %s19
      %s22 = sshll.u32 [#allocation2], 4
      %s23 = int_to_ptr.vmem [resolvable:$true] %s22
      %25 = dma.hbm_to_vmem [thread:$0]  %s0, 128, %s23, [#allocation3]
    $region5: #{tpu_custom_call.1} parent=1 // pred_fallthru
      _
    // Predicated region
    $region6: #{tpu_custom_call.1} parent=1 // pred_check
      _
    $region7: #{tpu_custom_call.1} parent=1 // pred_check_branch
      %27 = sbr.rel (0) target = $region9
    $region8: #{tpu_custom_call.1} parent=1 // pred_region
      %s29 = ssub.s32 256, 256
      %30 = vsyncadd [#allocation6], %s29
      %s31 = sshll.u32 [#allocation5], 4
      %s32 = int_to_ptr.vmem [resolvable:$true] %s31
      %37 = dma.hbm_to_vmem [thread:$0]  %s1, 256, %s32, [#allocation6], 64, 64, 4
    $region9: #{tpu_custom_call.1} parent=1 // pred_fallthru
      _
    // Predicated region
    $region10: #{tpu_custom_call.1} parent=1 // pred_check
      _
    $region11: #{tpu_custom_call.1} parent=1 // pred_check_branch
      %39 = sbr.rel (0) target = $region13
    $region12: #{tpu_custom_call.1} parent=1 // pred_region
      _
    $region13: #{tpu_custom_call.1} parent=1 // pred_fallthru
      _
    // Predicated region
    $region14: #{tpu_custom_call.1} parent=1 // pred_check
      _
    $region15: #{tpu_custom_call.1} parent=1 // pred_check_branch
      %41 = sbr.rel (0) target = $region17
    $region16: #{tpu_custom_call.1} parent=1 // pred_region
      %s43 = ssub.s32 2048, 2048
      %44 = vsyncadd [#allocation6], %s43
      %s45 = sshll.u32 [#allocation7], 4
      %s46 = int_to_ptr.vmem [resolvable:$true] %s45
      %51 = dma.hbm_to_vmem [thread:$0]  %s3, 2048, %s46, [#allocation6], 64, 64, 4
    $region17: #{tpu_custom_call.1} parent=1 // pred_fallthru
      _
    // Predicated region
    $region18: #{tpu_custom_call.1} parent=1 // pred_check
      _
    $region19: #{tpu_custom_call.1} parent=1 // pred_check_branch
      %53 = sbr.rel (0) target = $region21
    $region20: #{tpu_custom_call.1} parent=1 // pred_region
      _
    $region21: #{tpu_custom_call.1} parent=1 // pred_fallthru
      _
    // Predicated region
    $region22: #{tpu_custom_call.1} parent=1 // pred_check
      _
    $region23: #{tpu_custom_call.1} parent=1 // pred_check_branch
      %55 = sbr.rel (0) target = $region25
    $region24: #{tpu_custom_call.1} parent=1 // pred_region
      %s57 = ssub.s32 1024, 1024
      %58 = vsyncadd [#allocation9], %s57
      %s59 = sshll.u32 [#allocation8], 4
      %s60 = int_to_ptr.vmem [resolvable:$true] %s59
      %65 = dma.hbm_to_vmem [thread:$0]  %s5, 1024, %s60, [#allocation9], 64, 64, 4
    $region25: #{tpu_custom_call.1} parent=1 // pred_fallthru
      _
    // Predicated region
    $region26: #{tpu_custom_call.1} parent=1 // pred_check
      _
    $region27: #{tpu_custom_call.1} parent=1 // pred_check_branch
      %67 = sbr.rel (0) target = $region29
    $region28: #{tpu_custom_call.1} parent=1 // pred_region
      _
    $region29: #{tpu_custom_call.1} parent=1 // pred_fallthru
      _
    // Predicated region
    $region30: #{tpu_custom_call.1} parent=1 // pred_check
      _
    $region31: #{tpu_custom_call.1} parent=1 // pred_check_branch
      %69 = sbr.rel (0) target = $region33
    $region32: #{tpu_custom_call.1} parent=1 // pred_region
      %70 = dma.done [#allocation3], 128
    $region33: #{tpu_custom_call.1} parent=1 // pred_fallthru
      _
    // Predicated region
    $region34: #{tpu_custom_call.1} parent=1 // pred_check
      _
    $region35: #{tpu_custom_call.1} parent=1 // pred_check_branch
      %72 = sbr.rel (0) target = $region37
    $region36: #{tpu_custom_call.1} parent=1 // pred_region
      %73 = dma.done [#allocation6], 256
    $region37: #{tpu_custom_call.1} parent=1 // pred_fallthru
      _
    // Predicated region
    $region38: #{tpu_custom_call.1} parent=1 // pred_check
      _
    $region39: #{tpu_custom_call.1} parent=1 // pred_check_branch
      %75 = sbr.rel (0) target = $region41
    $region40: #{tpu_custom_call.1} parent=1 // pred_region
      %76 = dma.done [#allocation6], 2048
    $region41: #{tpu_custom_call.1} parent=1 // pred_fallthru
      _
    // Predicated region
    $region42: #{tpu_custom_call.1} parent=1 // pred_check
      _
    $region43: #{tpu_custom_call.1} parent=1 // pred_check_branch
      %78 = sbr.rel (0) target = $region45
    $region44: #{tpu_custom_call.1} parent=1 // pred_region
      %79 = dma.done [#allocation9], 1024
    $region45: #{tpu_custom_call.1} parent=1 // pred_fallthru
      _
    %v81 = vld [vmem:[#allocation2] sm:$0xff]
    %v82 = vpack.c.bf16 %v81, %v81
    %v83 = vld [vmem:[#allocation5] sm:$0xf]
    %v84 = vld [vmem:[#allocation5 + $0x4] sm:$0xf]
    %v85 = vld [vmem:[#allocation5 + $0x8] sm:$0xf]
    %v86 = vld [vmem:[#allocation5 + $0xc] sm:$0xf]
    %v87 = vld [vmem:[%s2] sm:$0x1]
    %v89 = vlaneseq
    %v90 = vshrl.u32 %v89, 7
    %v91 = vsub.s32 0, %v90
    %v92 = vrot.slane %v87, %v91
    %v98 = vunpack.c.l.b16 %v83
    %v99 = vunpack.c.l.b16 %v84
    %v100 = vunpack.c.l.b16 %v85
    %v101 = vunpack.c.l.b16 %v86
    %v102 = vpack.c.b16 %v99, %v98
    %v103 = vpack.c.b16 %v101, %v100
    %vm106 = vcmask 261120
    %v108 = vsel %vm106, %v82, 0
    %110 = vmatprep.subr.bf16.mxu0 0
    %111 = vmatpush1.bf16.msra.mxu0 %v102
    %112 = vmatprep.subr.bf16.mxu0 0
    %113 = vmatpush1.bf16.msra.mxu0 %v103
    %114 = vmatprep.subr.bf16.mxu0 0
    %115 = vmatpush1.bf16.msra.mxu0 0
    %116 = vmatprep.subr.bf16.mxu0 0
    %117 = vmatpush1.bf16.msra.mxu0 0
    %118 = vmatprep.subr.bf16.mxu0 0
    %119 = vmatpush1.bf16.msra.mxu0 0
    %120 = vmatprep.subr.bf16.mxu0 0
    %121 = vmatpush1.bf16.msra.mxu0 0
    %122 = vmatprep.subr.bf16.mxu0 0
    %123 = vmatpush1.bf16.msra.mxu0 0
    %124 = vmatprep.subr.bf16.mxu0 0
    %125 = vmatpush1.bf16.msra.mxu0 0
    %126 = vmatprep.subr.bf16.mxu0 0
    %127 = vmatpush1.bf16.msra.mxu0 0
    %128 = vmatprep.subr.bf16.mxu0 0
    %129 = vmatpush1.bf16.msra.mxu0 0
    %130 = vmatprep.subr.bf16.mxu0 0
    %131 = vmatpush1.bf16.msra.mxu0 0
    %132 = vmatprep.subr.bf16.mxu0 0
    %133 = vmatpush1.bf16.msra.mxu0 0
    %134 = vmatprep.subr.bf16.mxu0 0
    %135 = vmatpush1.bf16.msra.mxu0 0
    %136 = vmatprep.subr.bf16.mxu0 0
    %137 = vmatpush1.bf16.msra.mxu0 0
    %138 = vmatprep.subr.bf16.mxu0 0
    %139 = vmatpush1.bf16.msra.mxu0 0
    %140 = vmatprep.subr.bf16.mxu0 0
    %141 = vmatpush1.bf16.msra.mxu0 0
    %142 = vmatprep.mubr.bf16.mxu0 0
    %143 = vmatmul.mubr.bf16.gmra.mrb[0].mxu0 %v108
    %v144 = vpop.f32.mrb[0].mxu0
    %v145 = vadd.f32 %v92, %v144
    %v146 = vpop.f32.mrb[0].mxu0
    %v147 = vpop.f32.mrb[0].mxu0
    %v148 = vpop.f32.mrb[0].mxu0
    %149 = vdwg.mxu0
    %v150 = vmax.f32 %v145, 0.0
    %v151 = vpack.c.bf16 %v150, %v150
    %v152 = vld [vmem:[#allocation7] sm:$0xf]
    %v153 = vld [vmem:[#allocation7 + $0x4] sm:$0xf]
    %v154 = vld [vmem:[#allocation7 + $0x8] sm:$0xf]
    %v155 = vld [vmem:[#allocation7 + $0xc] sm:$0xf]
    %v156 = vld [vmem:[#allocation7 + $0x10] sm:$0xf]
    %v157 = vld [vmem:[#allocation7 + $0x14] sm:$0xf]
    %v158 = vld [vmem:[#allocation7 + $0x18] sm:$0xf]
    %v159 = vld [vmem:[#allocation7 + $0x1c] sm:$0xf]
    %v160 = vld [vmem:[#allocation7 + $0x20] sm:$0xf]
    %v161 = vld [vmem:[#allocation7 + $0x24] sm:$0xf]
    %v162 = vld [vmem:[#allocation7 + $0x28] sm:$0xf]
    %v163 = vld [vmem:[#allocation7 + $0x2c] sm:$0xf]
    %v164 = vld [vmem:[#allocation7 + $0x30] sm:$0xf]
    %v165 = vld [vmem:[#allocation7 + $0x34] sm:$0xf]
    %v166 = vld [vmem:[#allocation7 + $0x38] sm:$0xf]
    %v167 = vld [vmem:[#allocation7 + $0x3c] sm:$0xf]
    %v168 = vld [vmem:[%s4] sm:$0x1]
    %v170 = vlaneseq
    %v171 = vshrl.u32 %v170, 7
    %v172 = vsub.s32 0, %v171
    %v173 = vrot.slane %v168, %v172
    %v191 = vunpack.c.l.b16 %v152
    %v192 = vunpack.c.l.b16 %v153
    %v193 = vunpack.c.l.b16 %v154
    %v194 = vunpack.c.l.b16 %v155
    %v195 = vunpack.c.l.b16 %v156
    %v196 = vunpack.c.l.b16 %v157
    %v197 = vunpack.c.l.b16 %v158
    %v198 = vunpack.c.l.b16 %v159
    %v199 = vunpack.c.l.b16 %v160
    %v200 = vunpack.c.l.b16 %v161
    %v201 = vunpack.c.l.b16 %v162
    %v202 = vunpack.c.l.b16 %v163
    %v203 = vunpack.c.l.b16 %v164
    %v204 = vunpack.c.l.b16 %v165
    %v205 = vunpack.c.l.b16 %v166
    %v206 = vunpack.c.l.b16 %v167
    %v207 = vpack.c.b16 %v192, %v191
    %v208 = vpack.c.b16 %v194, %v193
    %v209 = vpack.c.b16 %v196, %v195
    %v210 = vpack.c.b16 %v198, %v197
    %v211 = vpack.c.b16 %v200, %v199
    %v212 = vpack.c.b16 %v202, %v201
    %v213 = vpack.c.b16 %v204, %v203
    %v214 = vpack.c.b16 %v206, %v205
    %223 = vmatprep.subr.bf16.mxu0 0
    %224 = vmatpush1.bf16.msra.mxu0 %v207
    %225 = vmatprep.subr.bf16.mxu0 0
    %226 = vmatpush1.bf16.msra.mxu0 %v208
    %227 = vmatprep.subr.bf16.mxu0 0
    %228 = vmatpush1.bf16.msra.mxu0 %v209
    %229 = vmatprep.subr.bf16.mxu0 0
    %230 = vmatpush1.bf16.msra.mxu0 %v210
    %231 = vmatprep.subr.bf16.mxu0 0
    %232 = vmatpush1.bf16.msra.mxu0 %v211
    %233 = vmatprep.subr.bf16.mxu0 0
    %234 = vmatpush1.bf16.msra.mxu0 %v212
    %235 = vmatprep.subr.bf16.mxu0 0
    %236 = vmatpush1.bf16.msra.mxu0 %v213
    %237 = vmatprep.subr.bf16.mxu0 0
    %238 = vmatpush1.bf16.msra.mxu0 %v214
    %239 = vmatprep.subr.bf16.mxu0 0
    %240 = vmatpush1.bf16.msra.mxu0 0
    %241 = vmatprep.subr.bf16.mxu0 0
    %242 = vmatpush1.bf16.msra.mxu0 0
    %243 = vmatprep.subr.bf16.mxu0 0
    %244 = vmatpush1.bf16.msra.mxu0 0
    %245 = vmatprep.subr.bf16.mxu0 0
    %246 = vmatpush1.bf16.msra.mxu0 0
    %247 = vmatprep.subr.bf16.mxu0 0
    %248 = vmatpush1.bf16.msra.mxu0 0
    %249 = vmatprep.subr.bf16.mxu0 0
    %250 = vmatpush1.bf16.msra.mxu0 0
    %251 = vmatprep.subr.bf16.mxu0 0
    %252 = vmatpush1.bf16.msra.mxu0 0
    %253 = vmatprep.subr.bf16.mxu0 0
    %254 = vmatpush1.bf16.msra.mxu0 0
    %255 = vmatprep.mubr.bf16.mxu0 0
    %256 = vmatmul.mubr.bf16.gmra.mrb[0].mxu0 %v151
    %v257 = vpop.f32.mrb[0].mxu0
    %v258 = vadd.f32 %v173, %v257
    %v259 = vpop.f32.mrb[0].mxu0
    %v260 = vpop.f32.mrb[0].mxu0
    %v261 = vpop.f32.mrb[0].mxu0
    %262 = vdwg.mxu0
    %v263 = vmax.f32 %v258, 0.0
    %v264 = vpack.c.bf16 %v263, %v263
    %s265 = scalar_lea.vmem [#allocation7], 64
    %v266 = vld [vmem:[%s265] sm:$0xf]
    %v267 = vld [vmem:[%s265 + $0x4] sm:$0xf]
    %v268 = vld [vmem:[%s265 + $0x8] sm:$0xf]
    %v269 = vld [vmem:[%s265 + $0xc] sm:$0xf]
    %v270 = vld [vmem:[%s265 + $0x10] sm:$0xf]
    %v271 = vld [vmem:[%s265 + $0x14] sm:$0xf]
    %v272 = vld [vmem:[%s265 + $0x18] sm:$0xf]
    %v273 = vld [vmem:[%s265 + $0x1c] sm:$0xf]
    %v274 = vld [vmem:[%s265 + $0x20] sm:$0xf]
    %v275 = vld [vmem:[%s265 + $0x24] sm:$0xf]
    %v276 = vld [vmem:[%s265 + $0x28] sm:$0xf]
    %v277 = vld [vmem:[%s265 + $0x2c] sm:$0xf]
    %v278 = vld [vmem:[%s265 + $0x30] sm:$0xf]
    %v279 = vld [vmem:[%s265 + $0x34] sm:$0xf]
    %v280 = vld [vmem:[%s265 + $0x38] sm:$0xf]
    %v281 = vld [vmem:[%s265 + $0x3c] sm:$0xf]
    %s282 = scalar_lea.vmem %s4, 1
    %v283 = vld [vmem:[%s282] sm:$0x1]
    %v285 = vlaneseq
    %v286 = vshrl.u32 %v285, 7
    %v287 = vsub.s32 0, %v286
    %v288 = vrot.slane %v283, %v287
    %v306 = vunpack.c.l.b16 %v266
    %v307 = vunpack.c.l.b16 %v267
    %v308 = vunpack.c.l.b16 %v268
    %v309 = vunpack.c.l.b16 %v269
    %v310 = vunpack.c.l.b16 %v270
    %v311 = vunpack.c.l.b16 %v271
    %v312 = vunpack.c.l.b16 %v272
    %v313 = vunpack.c.l.b16 %v273
    %v314 = vunpack.c.l.b16 %v274
    %v315 = vunpack.c.l.b16 %v275
    %v316 = vunpack.c.l.b16 %v276
    %v317 = vunpack.c.l.b16 %v277
    %v318 = vunpack.c.l.b16 %v278
    %v319 = vunpack.c.l.b16 %v279
    %v320 = vunpack.c.l.b16 %v280
    %v321 = vunpack.c.l.b16 %v281
    %v322 = vpack.c.b16 %v307, %v306
    %v323 = vpack.c.b16 %v309, %v308
    %v324 = vpack.c.b16 %v311, %v310
    %v325 = vpack.c.b16 %v313, %v312
    %v326 = vpack.c.b16 %v315, %v314
    %v327 = vpack.c.b16 %v317, %v316
    %v328 = vpack.c.b16 %v319, %v318
    %v329 = vpack.c.b16 %v321, %v320
    %338 = vmatprep.subr.bf16.mxu0 0
    %339 = vmatpush1.bf16.msra.mxu0 %v322
    %340 = vmatprep.subr.bf16.mxu0 0
    %341 = vmatpush1.bf16.msra.mxu0 %v323
    %342 = vmatprep.subr.bf16.mxu0 0
    %343 = vmatpush1.bf16.msra.mxu0 %v324
    %344 = vmatprep.subr.bf16.mxu0 0
    %345 = vmatpush1.bf16.msra.mxu0 %v325
    %346 = vmatprep.subr.bf16.mxu0 0
    %347 = vmatpush1.bf16.msra.mxu0 %v326
    %348 = vmatprep.subr.bf16.mxu0 0
    %349 = vmatpush1.bf16.msra.mxu0 %v327
    %350 = vmatprep.subr.bf16.mxu0 0
    %351 = vmatpush1.bf16.msra.mxu0 %v328
    %352 = vmatprep.subr.bf16.mxu0 0
    %353 = vmatpush1.bf16.msra.mxu0 %v329
    %354 = vmatprep.subr.bf16.mxu0 0
    %355 = vmatpush1.bf16.msra.mxu0 0
    %356 = vmatprep.subr.bf16.mxu0 0
    %357 = vmatpush1.bf16.msra.mxu0 0
    %358 = vmatprep.subr.bf16.mxu0 0
    %359 = vmatpush1.bf16.msra.mxu0 0
    %360 = vmatprep.subr.bf16.mxu0 0
    %361 = vmatpush1.bf16.msra.mxu0 0
    %362 = vmatprep.subr.bf16.mxu0 0
    %363 = vmatpush1.bf16.msra.mxu0 0
    %364 = vmatprep.subr.bf16.mxu0 0
    %365 = vmatpush1.bf16.msra.mxu0 0
    %366 = vmatprep.subr.bf16.mxu0 0
    %367 = vmatpush1.bf16.msra.mxu0 0
    %368 = vmatprep.subr.bf16.mxu0 0
    %369 = vmatpush1.bf16.msra.mxu0 0
    %370 = vmatprep.mubr.bf16.mxu0 0
    %371 = vmatmul.mubr.bf16.gmra.mrb[0].mxu0 %v264
    %v372 = vpop.f32.mrb[0].mxu0
    %v373 = vadd.f32 %v288, %v372
    %v374 = vpop.f32.mrb[0].mxu0
    %v375 = vpop.f32.mrb[0].mxu0
    %v376 = vpop.f32.mrb[0].mxu0
    %377 = vdwg.mxu0
    %v378 = vmax.f32 %v373, 0.0
    %v379 = vpack.c.bf16 %v378, %v378
    %v380 = vld [vmem:[#allocation8] sm:$0xf]
    %v381 = vld [vmem:[#allocation8 + $0x4] sm:$0xf]
    %v382 = vld [vmem:[#allocation8 + $0x8] sm:$0xf]
    %v383 = vld [vmem:[#allocation8 + $0xc] sm:$0xf]
    %v384 = vld [vmem:[#allocation8 + $0x10] sm:$0xf]
    %v385 = vld [vmem:[#allocation8 + $0x14] sm:$0xf]
    %v386 = vld [vmem:[#allocation8 + $0x18] sm:$0xf]
    %v387 = vld [vmem:[#allocation8 + $0x1c] sm:$0xf]
    %v388 = vld [vmem:[#allocation8 + $0x20] sm:$0xf]
    %v389 = vld [vmem:[#allocation8 + $0x24] sm:$0xf]
    %v390 = vld [vmem:[#allocation8 + $0x28] sm:$0xf]
    %v391 = vld [vmem:[#allocation8 + $0x2c] sm:$0xf]
    %v392 = vld [vmem:[#allocation8 + $0x30] sm:$0xf]
    %v393 = vld [vmem:[#allocation8 + $0x34] sm:$0xf]
    %v394 = vld [vmem:[#allocation8 + $0x38] sm:$0xf]
    %v395 = vld [vmem:[#allocation8 + $0x3c] sm:$0xf]
    %v396 = vld [vmem:[%s6] sm:$0x1]
    %v398 = vlaneseq
    %v399 = vshrl.u32 %v398, 7
    %v400 = vsub.s32 0, %v399
    %v401 = vrot.slane %v396, %v400
    %v419 = vunpack.c.l.b16 %v380
    %v420 = vunpack.c.l.b16 %v381
    %v421 = vunpack.c.l.b16 %v382
    %v422 = vunpack.c.l.b16 %v383
    %v423 = vunpack.c.l.b16 %v384
    %v424 = vunpack.c.l.b16 %v385
    %v425 = vunpack.c.l.b16 %v386
    %v426 = vunpack.c.l.b16 %v387
    %v427 = vunpack.c.l.b16 %v388
    %v428 = vunpack.c.l.b16 %v389
    %v429 = vunpack.c.l.b16 %v390
    %v430 = vunpack.c.l.b16 %v391
    %v431 = vunpack.c.l.b16 %v392
    %v432 = vunpack.c.l.b16 %v393
    %v433 = vunpack.c.l.b16 %v394
    %v434 = vunpack.c.l.b16 %v395
    %v435 = vpack.c.b16 %v420, %v419
    %v436 = vpack.c.b16 %v422, %v421
    %v437 = vpack.c.b16 %v424, %v423
    %v438 = vpack.c.b16 %v426, %v425
    %v439 = vpack.c.b16 %v428, %v427
    %v440 = vpack.c.b16 %v430, %v429
    %v441 = vpack.c.b16 %v432, %v431
    %v442 = vpack.c.b16 %v434, %v433
    %451 = vmatprep.subr.bf16.mxu0 0
    %452 = vmatpush1.bf16.msra.mxu0 %v435
    %453 = vmatprep.subr.bf16.mxu0 0
    %454 = vmatpush1.bf16.msra.mxu0 %v436
    %455 = vmatprep.subr.bf16.mxu0 0
    %456 = vmatpush1.bf16.msra.mxu0 %v437
    %457 = vmatprep.subr.bf16.mxu0 0
    %458 = vmatpush1.bf16.msra.mxu0 %v438
    %459 = vmatprep.subr.bf16.mxu0 0
    %460 = vmatpush1.bf16.msra.mxu0 %v439
    %461 = vmatprep.subr.bf16.mxu0 0
    %462 = vmatpush1.bf16.msra.mxu0 %v440
    %463 = vmatprep.subr.bf16.mxu0 0
    %464 = vmatpush1.bf16.msra.mxu0 %v441
    %465 = vmatprep.subr.bf16.mxu0 0
    %466 = vmatpush1.bf16.msra.mxu0 %v442
    %467 = vmatprep.subr.bf16.mxu0 0
    %468 = vmatpush1.bf16.msra.mxu0 0
    %469 = vmatprep.subr.bf16.mxu0 0
    %470 = vmatpush1.bf16.msra.mxu0 0
    %471 = vmatprep.subr.bf16.mxu0 0
    %472 = vmatpush1.bf16.msra.mxu0 0
    %473 = vmatprep.subr.bf16.mxu0 0
    %474 = vmatpush1.bf16.msra.mxu0 0
    %475 = vmatprep.subr.bf16.mxu0 0
    %476 = vmatpush1.bf16.msra.mxu0 0
    %477 = vmatprep.subr.bf16.mxu0 0
    %478 = vmatpush1.bf16.msra.mxu0 0
    %479 = vmatprep.subr.bf16.mxu0 0
    %480 = vmatpush1.bf16.msra.mxu0 0
    %481 = vmatprep.subr.bf16.mxu0 0
    %482 = vmatpush1.bf16.msra.mxu0 0
    %483 = vmatprep.mubr.bf16.mxu0 0
    %484 = vmatmul.mubr.bf16.gmra.mrb[0].mxu0 %v379
    %v485 = vpop.f32.mrb[0].mxu0
    %v486 = vadd.f32 %v401, %v485
    %v487 = vpop.f32.mrb[0].mxu0
    %v488 = vpop.f32.mrb[0].mxu0
    %v489 = vpop.f32.mrb[0].mxu0
    %490 = vdwg.mxu0
    %v491 = vlaneseq
    %v492 = vand.u32 %v491, 127
    %vm493 = vcmp.gt.f32.partialorder %v486, 20.0
    %v494 = vmin.f32 %v486, 20.0
    %v495 = vmul.f32 %v494, 1.442695
    %v496 = vpow.pop %v495
    %v497 = vadd.f32 %v496, 1.0
    %v498 = vlog2.pop %v497
    %v499 = vmul.f32 %v498, 0.6931472
    %v500 = vmul.f32 -0.5, %v496
    %v501 = vadd.f32 %v500, 1.0
    %v502 = vmul.f32 %v501, %v496
    %v503 = vand.u32 2147483647, %v496
    %vm504 = vcmp.lt.f32.partialorder %v503, 0.0004427343
    %v505 = vsel %vm504, %v502, %v499
    %v506 = vsel %vm493, %v486, %v505
    %v507 = vadd.f32 %v506, 1e-05
    %vm508 = vcmp.lt.s32.totalorder %v492, 64
    %v509 = vsel %vm508, %v486, %v507
    %510 = vst [vmem:[#allocation10] sm:$0xff] %v509
    // Predicated region
    $region46: #{tpu_custom_call.1} parent=1 // pred_check
      _
    $region47: #{tpu_custom_call.1} parent=1 // pred_check_branch
      %512 = sbr.rel (0) target = $region49
    $region48: #{tpu_custom_call.1} parent=1 // pred_region
      %s514 = ssub.s32 128, 128
      %515 = vsyncadd [#allocation4], %s514
      %s517 = sshll.u32 [#allocation10], 4
      %s518 = int_to_ptr.vmem [resolvable:$true] %s517
      %520 = dma.vmem_to_hbm [thread:$0]  %s518, 128, %s7, [#allocation4]
    $region49: #{tpu_custom_call.1} parent=1 // pred_fallthru
      _
    // Predicated region
    $region50: #{tpu_custom_call.1} parent=1 // pred_check
      _
    $region51: #{tpu_custom_call.1} parent=1 // pred_check_branch
      %522 = sbr.rel (0) target = $region53
    $region52: #{tpu_custom_call.1} parent=1 // pred_region
      %523 = dma.done [#allocation4], 128
    $region53: #{tpu_custom_call.1} parent=1 // pred_fallthru
      _
    %524 = vsyncpa [#allocation3], 1
    %525 = vsyncpa [#allocation6], 1
    %526 = vsyncpa [#allocation9], 1
    %527 = vsyncpa [#allocation4], 1

</llo_original>
